<compile_context>
chip_gen: v5e
topology: v5e:2x2
jax: 0.10.0
libtpu: 0.0.40
codegen_flags: <defaults>
</compile_context>

<pallas_src>
import functools

import jax
import jax.numpy as jnp
from jax.experimental import pallas as pl
from jax.experimental.pallas import tpu as pltpu


def _round_up(x, m):
    return (x + m - 1) // m * m


def pcnn_kernel(x_ref, mv_ref, wconv_ref, bconv_ref, wlin_ref, blin_ref, out_ref,
                *, kernel_size, pad):
    # x_ref    : (TB, L, C_in)   embedded sentences (matmul dtype, e.g. bf16)
    # mv_ref   : (TB, L, 3)      minus * (1 - mask_embedding(mask)), f32
    # wconv_ref: (K*C_in, Hp)    conv taps, flattened & lane-padded (matmul dtype)
    # bconv_ref: (1, Hp)         f32 (zero in the padded lanes)
    # wlin_ref : (3*Hp, Clsp)    f32 (zero rows/cols in the padding)
    # blin_ref : (1, Clsp)       f32
    # out_ref  : (TB, Clsp)      logits, f32, lane-dense
    x = x_ref[...]
    TB, L, C = x.shape
    Hp = wconv_ref.shape[-1]
    Clsp = out_ref.shape[-1]

    # In-kernel im2col: K shifted copies (zero halo at the sequence boundaries)
    # concatenated along lanes -> a single MXU contraction of size K*C_in.
    taps = []
    for k in range(kernel_size):
        off = k - pad
        if off == 0:
            shifted = x
        elif off < 0:
            zeros = jnp.zeros((TB, -off, C), x.dtype)
            shifted = jnp.concatenate([zeros, x[:, :L + off, :]], axis=1)
        else:
            zeros = jnp.zeros((TB, off, C), x.dtype)
            shifted = jnp.concatenate([x[:, off:, :], zeros], axis=1)
        taps.append(shifted)
    slab = jnp.concatenate(taps, axis=-1).reshape(TB * L, kernel_size * C)

    # Conv1d as one batched matmul: (TB*L, K*C_in) x (K*C_in, Hp), f32 accumulate.
    conv = jnp.dot(slab, wconv_ref[...],
                   preferred_element_type=jnp.float32) + bconv_ref[...]
    conv = conv.reshape(TB, L, Hp)                               # (TB, L, Hp) f32

    # Piecewise masked ReLU + max-pool over the sequence, tanh, then an
    # accumulating per-piece classifier matmul (replaces the lane concat).
    mv = mv_ref[...]                                             # (TB, L, 3)
    logits = jnp.zeros((TB, Clsp), jnp.float32)
    for i in range(3):
        z = jnp.maximum(conv + mv[:, :, i:i + 1], 0.0)           # (TB, L, Hp)
        feat = jnp.tanh(jnp.max(z, axis=1))                      # (TB, Hp)
        logits = logits + jnp.dot(feat, wlin_ref[i * Hp:(i + 1) * Hp, :],
                                  preferred_element_type=jnp.float32)
    out_ref[...] = logits + blin_ref[...]


def init_params(key, *, corpus_size, embedding_dim, pos_dim, class_size,
                kernel_size, hidden_size, max_len):
    ks = jax.random.split(key, 7)
    input_dim = embedding_dim + 2 * pos_dim
    word = 0.1 * jax.random.normal(ks[0], (corpus_size, embedding_dim), jnp.float32)
    pos1 = 0.1 * jax.random.normal(ks[1], (2 * max_len, pos_dim), jnp.float32)
    pos2 = 0.1 * jax.random.normal(ks[2], (2 * max_len, pos_dim), jnp.float32)
    # padding_idx=0 in the PyTorch position embeddings -> zero row 0.
    pos1 = pos1.at[0].set(0.0)
    pos2 = pos2.at[0].set(0.0)
    # Conv1d weight in PyTorch is (H, C_in, K); we store it as (K, C_in, H).
    wconv = 0.1 * jax.random.normal(ks[3], (kernel_size, input_dim, hidden_size),
                                    jnp.float32)
    bconv = 0.1 * jax.random.normal(ks[4], (1, hidden_size), jnp.float32)
    # Linear weight in PyTorch is (class_size, 3H); we store it as (3H, class_size).
    wlin = 0.1 * jax.random.normal(ks[5], (3 * hidden_size, class_size), jnp.float32)
    blin = 0.1 * jax.random.normal(ks[6], (1, class_size), jnp.float32)
    return dict(word=word, pos1=pos1, pos2=pos2,
                wconv=wconv, bconv=bconv, wlin=wlin, blin=blin)


def _embed(params, text_index, pos1, pos2, mask, matmul_dtype, minus):
    sen = params["word"][text_index]                       # (B, L, E)
    p1 = params["pos1"][pos1]                              # (B, L, P)
    p2 = params["pos2"][pos2]                              # (B, L, P)
    x = jnp.concatenate([sen, p1, p2], axis=2).astype(matmul_dtype)   # (B, L, C_in)
    mask_table = jnp.array([[0., 0., 0.],
                            [1., 0., 0.],
                            [0., 1., 0.],
                            [0., 0., 1.]], jnp.float32)
    mv = minus * (1.0 - mask_table[mask])                  # (B, L, 3), pre-scaled
    return x, mv


def pcnn_logits(params, text_index, pos1, pos2, mask, *, kernel_size, padding_size,
                max_len, batch_tile=64, matmul_dtype=jnp.bfloat16, minus=1e-6):
    B, L = text_index.shape
    K, pad = kernel_size, padding_size
    # Conv preserves length and MaxPool1d(max_len) pools the full sequence
    # (the only configuration under which the reference forward is well-formed).
    assert K == 2 * pad + 1 and L == max_len

    x, mv = _embed(params, text_index, pos1, pos2, mask, matmul_dtype, minus)
    C_in = x.shape[-1]
    H = params["wconv"].shape[-1]
    Cls = params["wlin"].shape[-1]
    Hp = _round_up(H, 128)                                 # lane-dense hidden dim
    Clsp = _round_up(Cls, 128)                             # lane-dense output stores

    # Lane-dense, flattened weights (zero padding keeps the real logits exact).
    wconv = jnp.pad(params["wconv"], ((0, 0), (0, 0), (0, Hp - H)))
    wconv = wconv.reshape(K * C_in, Hp).astype(matmul_dtype)
    bconv = jnp.pad(params["bconv"], ((0, 0), (0, Hp - H)))
    wlin = jnp.pad(params["wlin"].reshape(3, H, Cls),
                   ((0, 0), (0, Hp - H), (0, Clsp - Cls))).reshape(3 * Hp, Clsp)
    blin = jnp.pad(params["blin"], ((0, 0), (0, Clsp - Cls)))

    # Batch tiling: TB rows per grid step (B/TB steps, megacore-parallel).
    TB = min(batch_tile, B)
    Bp = _round_up(B, TB)
    if Bp != B:
        x = jnp.pad(x, ((0, Bp - B), (0, 0), (0, 0)))
        mv = jnp.pad(mv, ((0, Bp - B), (0, 0), (0, 0)))

    kernel = functools.partial(pcnn_kernel, kernel_size=K, pad=pad)
    logits = pl.pallas_call(
        kernel,
        out_shape=jax.ShapeDtypeStruct((Bp, Clsp), jnp.float32),
        grid_spec=pltpu.PrefetchScalarGridSpec(
            num_scalar_prefetch=0,
            grid=(Bp // TB,),
            in_specs=[
                pl.BlockSpec((TB, L, C_in), lambda b: (b, 0, 0)),
                pl.BlockSpec((TB, L, 3), lambda b: (b, 0, 0)),
                pl.BlockSpec((K * C_in, Hp), lambda b: (0, 0)),
                pl.BlockSpec((1, Hp), lambda b: (0, 0)),
                pl.BlockSpec((3 * Hp, Clsp), lambda b: (0, 0)),
                pl.BlockSpec((1, Clsp), lambda b: (0, 0)),
            ],
            out_specs=pl.BlockSpec((TB, Clsp), lambda b: (b, 0)),
        ),
        compiler_params=pltpu.CompilerParams(dimension_semantics=("parallel",)),
    )(x, mv, wconv, bconv, wlin, blin)

    return logits[:B, :Cls]                                # slice padding back off


def pcnn_forward(params, text_index, pos1, pos2, mask, *, kernel_size, padding_size,
                 max_len, batch_tile=64, matmul_dtype=jnp.bfloat16):
    # nn.Dropout is identity at inference time.
    # TODO(synk): training-mode dropout and the CrossEntropyLoss (label) branch are
    # not implemented; only the label=None inference path is reproduced.
    logits = pcnn_logits(params, text_index, pos1, pos2, mask,
                         kernel_size=kernel_size, padding_size=padding_size,
                         max_len=max_len, batch_tile=batch_tile,
                         matmul_dtype=matmul_dtype)
    return jnp.argmax(logits, axis=-1)


def pcnn_logits_reference(params, text_index, pos1, pos2, mask, *, kernel_size,
                          padding_size, matmul_dtype=jnp.bfloat16, minus=1e-6):
    # Pure-JAX reference (same operand quantization as the kernel) for validation.
    x, mv = _embed(params, text_index, pos1, pos2, mask, matmul_dtype, minus)
    x = x.astype(jnp.float32)
    B, L, _ = x.shape
    H = params["wconv"].shape[-1]
    xpad = jnp.pad(x, ((0, 0), (padding_size, padding_size), (0, 0)))
    conv = jnp.zeros((B, L, H), jnp.float32)
    for k in range(kernel_size):
        wk = params["wconv"][k].astype(matmul_dtype).astype(jnp.float32)
        conv = conv + jnp.einsum("blc,ch->blh", xpad[:, k:k + L, :], wk,
                                 precision=jax.lax.Precision.HIGHEST)
    conv = conv + params["bconv"]
    pools = [jnp.max(jnp.maximum(conv + mv[:, :, i:i + 1], 0.0), axis=1)
             for i in range(3)]
    feat = jnp.tanh(jnp.concatenate(pools, axis=-1))        # (B, 3H)
    return jnp.dot(feat, params["wlin"],
                   precision=jax.lax.Precision.HIGHEST) + params["blin"]


if __name__ == "__main__":
    # Small, forward-consistent shapes.
    corpus_size = 50
    embedding_dim = 16
    pos_dim = 8
    class_size = 8
    kernel_size = 3
    padding_size = 1
    hidden_size = 32
    max_len = 16
    batch = 2
    seq = max_len   # conv preserves length; MaxPool1d(max_len) then pools to 1

    key = jax.random.PRNGKey(0)
    kparam, kt, k1, k2, km = jax.random.split(key, 5)

    params = init_params(kparam, corpus_size=corpus_size,
                         embedding_dim=embedding_dim, pos_dim=pos_dim,
                         class_size=class_size, kernel_size=kernel_size,
                         hidden_size=hidden_size, max_len=max_len)

    text_index = jax.random.randint(kt, (batch, seq), 0, corpus_size, jnp.int32)
    pos1 = jax.random.randint(k1, (batch, seq), 0, 2 * max_len, jnp.int32)
    pos2 = jax.random.randint(k2, (batch, seq), 0, 2 * max_len, jnp.int32)
    mask = jax.random.randint(km, (batch, seq), 0, 4, jnp.int32)

    logits_fn = jax.jit(functools.partial(
        pcnn_logits, kernel_size=kernel_size, padding_size=padding_size,
        max_len=max_len))
    forward_fn = jax.jit(functools.partial(
        pcnn_forward, kernel_size=kernel_size, padding_size=padding_size,
        max_len=max_len))

    logits = jax.block_until_ready(logits_fn(params, text_index, pos1, pos2, mask))
    ref = pcnn_logits_reference(params, text_index, pos1, pos2, mask,
                                kernel_size=kernel_size, padding_size=padding_size)
    assert logits.shape == (batch, class_size)
    assert bool(jnp.allclose(logits, ref, rtol=1e-2, atol=1e-2)), (
        float(jnp.max(jnp.abs(logits - ref))))

    pred = jax.block_until_ready(forward_fn(params, text_index, pos1, pos2, mask))
    assert pred.shape == (batch,)
    print("KERNEL_OK")
</pallas_src>

<mosaic_0001>
module attributes {stable_mosaic.version = 11 : i64} {
  func.func @pcnn_kernel(%arg0: i32, %arg1: memref<2x16x32xbf16, #tpu.memory_space<vmem>>, %arg2: memref<2x16x3xf32, #tpu.memory_space<vmem>>, %arg3: memref<96x128xbf16, #tpu.memory_space<vmem>>, %arg4: memref<1x128xf32, #tpu.memory_space<vmem>>, %arg5: memref<384x128xf32, #tpu.memory_space<vmem>>, %arg6: memref<1x128xf32, #tpu.memory_space<vmem>>, %arg7: memref<2x128xf32, #tpu.memory_space<vmem>>) attributes {dimension_semantics = [#tpu.dimension_semantics<parallel>], iteration_bounds = array<i64: 1>, scalar_prefetch = 0 : i64, scratch_operands = 0 : i64, tpu.core_type = #tpu.core_type<tc>, window_params = [{transform_indices = @transform_0, window_bounds = array<i64: 2, 16, 32>}, {transform_indices = @transform_1, window_bounds = array<i64: 2, 16, 3>}, {pipeline_mode = #tpu.pipeline_mode<synchronous>, transform_indices = @transform_2, window_bounds = array<i64: 96, 128>}, {pipeline_mode = #tpu.pipeline_mode<synchronous>, transform_indices = @transform_3, window_bounds = array<i64: 1, 128>}, {pipeline_mode = #tpu.pipeline_mode<synchronous>, transform_indices = @transform_4, window_bounds = array<i64: 384, 128>}, {pipeline_mode = #tpu.pipeline_mode<synchronous>, transform_indices = @transform_5, window_bounds = array<i64: 1, 128>}, {transform_indices = @transform_6, window_bounds = array<i64: 2, 128>}]} {
    %c0 = arith.constant 0 : index
    %c0_0 = arith.constant 0 : index
    %c0_1 = arith.constant 0 : index
    %0 = vector.load %arg1[%c0, %c0_0, %c0_1] : memref<2x16x32xbf16, #tpu.memory_space<vmem>>, vector<2x16x32xbf16>
    %cst = arith.constant 0.000000e+00 : bf16
    %1 = vector.broadcast %cst : bf16 to vector<2x1x32xbf16>
    %2 = vector.extract_strided_slice %0 {offsets = [0, 0, 0], sizes = [2, 15, 32], strides = [1, 1, 1]} : vector<2x16x32xbf16> to vector<2x15x32xbf16>
    %3 = tpu.concatenate %1, %2 in 1 : vector<2x1x32xbf16>, vector<2x15x32xbf16> -> vector<2x16x32xbf16>
    %cst_2 = arith.constant 0.000000e+00 : bf16
    %4 = vector.broadcast %cst_2 : bf16 to vector<2x1x32xbf16>
    %5 = vector.extract_strided_slice %0 {offsets = [0, 1, 0], sizes = [2, 15, 32], strides = [1, 1, 1]} : vector<2x16x32xbf16> to vector<2x15x32xbf16>
    %6 = tpu.concatenate %5, %4 in 1 : vector<2x15x32xbf16>, vector<2x1x32xbf16> -> vector<2x16x32xbf16>
    %7 = tpu.concatenate %3, %0, %6 in 2 : vector<2x16x32xbf16>, vector<2x16x32xbf16>, vector<2x16x32xbf16> -> vector<2x16x96xbf16>
    %8 = vector.shape_cast %7 : vector<2x16x96xbf16> to vector<32x96xbf16>
    %c0_3 = arith.constant 0 : index
    %c0_4 = arith.constant 0 : index
    %9 = vector.load %arg3[%c0_3, %c0_4] : memref<96x128xbf16, #tpu.memory_space<vmem>>, vector<96x128xbf16>
    %cst_5 = arith.constant dense<0.000000e+00> : vector<32x128xf32>
    %10 = tpu.matmul %8, %9, %cst_5 {dimension_numbers = #tpu.dot_dimension_numbers<[1], [0], [0], [1], [0, 0, 1, 1], [], []>} : vector<32x96xbf16>, vector<96x128xbf16>, vector<32x128xf32> -> vector<32x128xf32>
    %c0_6 = arith.constant 0 : index
    %c0_7 = arith.constant 0 : index
    %11 = vector.load %arg4[%c0_6, %c0_7] : memref<1x128xf32, #tpu.memory_space<vmem>>, vector<1x128xf32>
    %12 = vector.broadcast %11 : vector<1x128xf32> to vector<32x128xf32>
    %13 = arith.addf %10, %12 : vector<32x128xf32>
    %14 = vector.shape_cast %13 : vector<32x128xf32> to vector<2x16x128xf32>
    %c0_8 = arith.constant 0 : index
    %c0_9 = arith.constant 0 : index
    %c0_10 = arith.constant 0 : index
    %15 = vector.load %arg2[%c0_8, %c0_9, %c0_10] : memref<2x16x3xf32, #tpu.memory_space<vmem>>, vector<2x16x3xf32>
    %cst_11 = arith.constant 0.000000e+00 : f32
    %16 = vector.broadcast %cst_11 : f32 to vector<2x128xf32>
    %17 = vector.extract_strided_slice %15 {offsets = [0, 0, 0], sizes = [2, 16, 1], strides = [1, 1, 1]} : vector<2x16x3xf32> to vector<2x16x1xf32>
    %18 = vector.broadcast %17 : vector<2x16x1xf32> to vector<2x16x128xf32>
    %19 = arith.addf %14, %18 : vector<2x16x128xf32>
    %cst_12 = arith.constant 0.000000e+00 : f32
    %20 = vector.broadcast %cst_12 : f32 to vector<2x16x128xf32>
    %21 = arith.maximumf %19, %20 : vector<2x16x128xf32>
    %cst_13 = arith.constant dense<0xFF800000> : vector<2x128xf32>
    %22 = vector.multi_reduction <maximumf>, %21, %cst_13 [1] : vector<2x16x128xf32> to vector<2x128xf32>
    %23 = math.tanh %22 : vector<2x128xf32>
    %c0_14 = arith.constant 0 : index
    %c0_15 = arith.constant 0 : index
    %24 = vector.load %arg5[%c0_14, %c0_15] : memref<384x128xf32, #tpu.memory_space<vmem>>, vector<128x128xf32>
    %cst_16 = arith.constant dense<0.000000e+00> : vector<2x128xf32>
    %25 = tpu.matmul %23, %24, %cst_16 {dimension_numbers = #tpu.dot_dimension_numbers<[1], [0], [0], [1], [0, 0, 1, 1], [], []>} : vector<2x128xf32>, vector<128x128xf32>, vector<2x128xf32> -> vector<2x128xf32>
    %26 = arith.addf %16, %25 : vector<2x128xf32>
    %27 = vector.extract_strided_slice %15 {offsets = [0, 0, 1], sizes = [2, 16, 1], strides = [1, 1, 1]} : vector<2x16x3xf32> to vector<2x16x1xf32>
    %28 = vector.broadcast %27 : vector<2x16x1xf32> to vector<2x16x128xf32>
    %29 = arith.addf %14, %28 : vector<2x16x128xf32>
    %cst_17 = arith.constant 0.000000e+00 : f32
    %30 = vector.broadcast %cst_17 : f32 to vector<2x16x128xf32>
    %31 = arith.maximumf %29, %30 : vector<2x16x128xf32>
    %cst_18 = arith.constant dense<0xFF800000> : vector<2x128xf32>
    %32 = vector.multi_reduction <maximumf>, %31, %cst_18 [1] : vector<2x16x128xf32> to vector<2x128xf32>
    %33 = math.tanh %32 : vector<2x128xf32>
    %c128 = arith.constant 128 : index
    %c0_19 = arith.constant 0 : index
    %34 = vector.load %arg5[%c128, %c0_19] : memref<384x128xf32, #tpu.memory_space<vmem>>, vector<128x128xf32>
    %cst_20 = arith.constant dense<0.000000e+00> : vector<2x128xf32>
    %35 = tpu.matmul %33, %34, %cst_20 {dimension_numbers = #tpu.dot_dimension_numbers<[1], [0], [0], [1], [0, 0, 1, 1], [], []>} : vector<2x128xf32>, vector<128x128xf32>, vector<2x128xf32> -> vector<2x128xf32>
    %36 = arith.addf %26, %35 : vector<2x128xf32>
    %37 = vector.extract_strided_slice %15 {offsets = [0, 0, 2], sizes = [2, 16, 1], strides = [1, 1, 1]} : vector<2x16x3xf32> to vector<2x16x1xf32>
    %38 = vector.broadcast %37 : vector<2x16x1xf32> to vector<2x16x128xf32>
    %39 = arith.addf %14, %38 : vector<2x16x128xf32>
    %cst_21 = arith.constant 0.000000e+00 : f32
    %40 = vector.broadcast %cst_21 : f32 to vector<2x16x128xf32>
    %41 = arith.maximumf %39, %40 : vector<2x16x128xf32>
    %cst_22 = arith.constant dense<0xFF800000> : vector<2x128xf32>
    %42 = vector.multi_reduction <maximumf>, %41, %cst_22 [1] : vector<2x16x128xf32> to vector<2x128xf32>
    %43 = math.tanh %42 : vector<2x128xf32>
    %c256 = arith.constant 256 : index
    %c0_23 = arith.constant 0 : index
    %44 = vector.load %arg5[%c256, %c0_23] : memref<384x128xf32, #tpu.memory_space<vmem>>, vector<128x128xf32>
    %cst_24 = arith.constant dense<0.000000e+00> : vector<2x128xf32>
    %45 = tpu.matmul %43, %44, %cst_24 {dimension_numbers = #tpu.dot_dimension_numbers<[1], [0], [0], [1], [0, 0, 1, 1], [], []>} : vector<2x128xf32>, vector<128x128xf32>, vector<2x128xf32> -> vector<2x128xf32>
    %46 = arith.addf %36, %45 : vector<2x128xf32>
    %c0_25 = arith.constant 0 : index
    %c0_26 = arith.constant 0 : index
    %47 = vector.load %arg6[%c0_25, %c0_26] : memref<1x128xf32, #tpu.memory_space<vmem>>, vector<1x128xf32>
    %48 = vector.broadcast %47 : vector<1x128xf32> to vector<2x128xf32>
    %49 = arith.addf %46, %48 : vector<2x128xf32>
    %c0_27 = arith.constant 0 : index
    %c0_28 = arith.constant 0 : index
    %50 = vector.load %arg7[%c0_27, %c0_28] : memref<2x128xf32, #tpu.memory_space<vmem>>, vector<2x128xf32>
    tpu.vector_store %arg7[%c0_27, %c0_28], %49 {strides = array<i32>} : memref<2x128xf32, #tpu.memory_space<vmem>>, vector<2x128xf32>,
    return
  }
  func.func @transform_0(%arg0: i32) -> (i32, i32, i32) {
    %c0_i32 = arith.constant 0 : i32
    %c0_i32_0 = arith.constant 0 : i32
    %c0_i32_1 = arith.constant 0 : i32
    return %arg0, %c0_i32, %c0_i32_0 : i32, i32, i32
  }
  func.func @transform_1(%arg0: i32) -> (i32, i32, i32) {
    %c0_i32 = arith.constant 0 : i32
    %c0_i32_0 = arith.constant 0 : i32
    %c0_i32_1 = arith.constant 0 : i32
    return %arg0, %c0_i32, %c0_i32_0 : i32, i32, i32
  }
  func.func @transform_2(%arg0: i32) -> (i32, i32) {
    %c0_i32 = arith.constant 0 : i32
    %c0_i32_0 = arith.constant 0 : i32
    %c0_i32_1 = arith.constant 0 : i32
    return %c0_i32, %c0_i32_0 : i32, i32
  }
  func.func @transform_3(%arg0: i32) -> (i32, i32) {
    %c0_i32 = arith.constant 0 : i32
    %c0_i32_0 = arith.constant 0 : i32
    %c0_i32_1 = arith.constant 0 : i32
    return %c0_i32, %c0_i32_0 : i32, i32
  }
  func.func @transform_4(%arg0: i32) -> (i32, i32) {
    %c0_i32 = arith.constant 0 : i32
    %c0_i32_0 = arith.constant 0 : i32
    %c0_i32_1 = arith.constant 0 : i32
    return %c0_i32, %c0_i32_0 : i32, i32
  }
  func.func @transform_5(%arg0: i32) -> (i32, i32) {
    %c0_i32 = arith.constant 0 : i32
    %c0_i32_0 = arith.constant 0 : i32
    %c0_i32_1 = arith.constant 0 : i32
    return %c0_i32, %c0_i32_0 : i32, i32
  }
  func.func @transform_6(%arg0: i32) -> (i32, i32) {
    %c0_i32 = arith.constant 0 : i32
    %c0_i32_0 = arith.constant 0 : i32
    return %arg0, %c0_i32 : i32, i32
  }
}

</mosaic_0001>

<llo_original>
// kernel: pcnn_logits.1
$region0: #{pcnn_logits.1}
  #allocation0 [shape = 'u32[]', space=smem, size = 0x4, offset = 0x4, fixed_abs, tag = 'smem constant byte address 0x4 - core index']
  #allocation1 [shape = 'u32[72,128]{1,0:T(1,128)}', space=vmem, size = 0x9000, scoped, tag = 'internal scratch']
  %s0 = inlined_call_operand.vmem [shape: bf16[2,16,32], index: 0, kind: input, shape index: {}]
  %s1 = inlined_call_operand.vmem [shape: f32[2,16,3], index: 1, kind: input, shape index: {}]
  %s2 = inlined_call_operand.vmem [shape: bf16[96,128], index: 2, kind: input, shape index: {}]
  %s3 = inlined_call_operand.vmem [shape: f32[1,128], index: 3, kind: input, shape index: {}]
  %s4 = inlined_call_operand.vmem [shape: f32[384,128], index: 4, kind: input, shape index: {}]
  %s5 = inlined_call_operand.vmem [shape: f32[1,128], index: 5, kind: input, shape index: {}]
  %s6 = inlined_call_operand.hbm [shape: f32[2,128], index: 6, kind: output, shape index: {}]
  %s7 = sld [smem:[#allocation0]]
  $region34: #{pcnn_logits.1} parent=0
    _
  %s9 = ssub.s32 1, %s7
  %s10 = scalar_select 0, %s9, %s7
  $region1: #{pcnn_logits.1} parent=0
    #allocation2 [shape = 'u8[1024]{0}', space=vmem, size = 0x400, scoped, tag = 'output window, operand 0, single buffered']
    #allocation3 [shape = 's32[1]{0}', space=sflag, size = 0x4, scoped, tag = 'scoped memory for pcnn_logits.1']
    %11 = vsyncpa [#allocation3], 0
    // Predicated region
    $region2: #{pcnn_logits.1} parent=1 // pred_check
      _
    $region3: #{pcnn_logits.1} parent=1 // pred_check_branch
      %13 = sbr.rel (0) target = $region5
    $region4: #{pcnn_logits.1} parent=1 // pred_region
      _
    $region5: #{pcnn_logits.1} parent=1 // pred_fallthru
      _
    // Predicated region
    $region6: #{pcnn_logits.1} parent=1 // pred_check
      _
    $region7: #{pcnn_logits.1} parent=1 // pred_check_branch
      %15 = sbr.rel (0) target = $region9
    $region8: #{pcnn_logits.1} parent=1 // pred_region
      _
    $region9: #{pcnn_logits.1} parent=1 // pred_fallthru
      _
    // Predicated region
    $region10: #{pcnn_logits.1} parent=1 // pred_check
      _
    $region11: #{pcnn_logits.1} parent=1 // pred_check_branch
      %17 = sbr.rel (0) target = $region13
    $region12: #{pcnn_logits.1} parent=1 // pred_region
      _
    $region13: #{pcnn_logits.1} parent=1 // pred_fallthru
      _
    // Predicated region
    $region14: #{pcnn_logits.1} parent=1 // pred_check
      _
    $region15: #{pcnn_logits.1} parent=1 // pred_check_branch
      %19 = sbr.rel (0) target = $region17
    $region16: #{pcnn_logits.1} parent=1 // pred_region
      _
    $region17: #{pcnn_logits.1} parent=1 // pred_fallthru
      _
    // Predicated region
    $region18: #{pcnn_logits.1} parent=1 // pred_check
      _
    $region19: #{pcnn_logits.1} parent=1 // pred_check_branch
      %21 = sbr.rel (0) target = $region21
    $region20: #{pcnn_logits.1} parent=1 // pred_region
      _
    $region21: #{pcnn_logits.1} parent=1 // pred_fallthru
      _
    // Predicated region
    $region22: #{pcnn_logits.1} parent=1 // pred_check
      _
    $region23: #{pcnn_logits.1} parent=1 // pred_check_branch
      %23 = sbr.rel (0) target = $region25
    $region24: #{pcnn_logits.1} parent=1 // pred_region
      _
    $region25: #{pcnn_logits.1} parent=1 // pred_fallthru
      _
    %v25 = vld [vmem:[%s0] sm:$0xf]
    %v26 = vld [vmem:[%s0 + $0x4] sm:$0xf]
    %v27 = vld [vmem:[%s0 + $0x8] sm:$0xf]
    %v28 = vld [vmem:[%s0 + $0xc] sm:$0xf]
    %v33 = vunpack.c.l.b16 %v25
    %v34 = vunpack.c.l.b16 %v26
    %v35 = vunpack.c.l.b16 %v27
    %v36 = vunpack.c.l.b16 %v28
    %v37 = vpack.c.b16 %v34, %v33
    %v38 = vpack.c.b16 %v36, %v35
    %v40 = vshrl.u32 %v37, 16
    %v42 = vrot.slane %v40, 7
    %v43 = vshll.u32 %v37, 16
    %v45 = vor.u32 %v42, %v43
    %v47 = vshrl.u32 %v38, 16
    %v49 = vrot.slane %v47, 7
    %v50 = vshll.u32 %v38, 16
    %v52 = vor.u32 %v49, %v50
    %vm55 = vcmask 1040384
    %vm56 = vsmask.f32 256
    %vm57 = vmand %vm55, %vm56
    %v58 = vsel %vm57, 0, %v45
    %v59 = vsel %vm57, 0, %v52
    %v60 = vrot.slane %v43, 1
    %v61 = vor.u32 %v40, %v60
    %v62 = vrot.slane %v50, 1
    %v63 = vor.u32 %v47, %v62
    %vm66 = vcmask 1047552
    %vm67 = vsmask.f32 7424
    %vm68 = vmand %vm66, %vm67
    %v69 = vsel %vm68, %v61, 0
    %v70 = vsel %vm68, %v63, 0
    %71 = vrot.lane.b32.xlu0 %v37, 32
    %v72 = vpop.permute.xlu0 %71
    %73 = vrot.lane.b32.xlu0 %v38, 32
    %v74 = vpop.permute.xlu0 %73
    %77 = vrot.lane.b32.xlu0 %v69, 64
    %v78 = vpop.permute.xlu0 %77
    %79 = vrot.lane.b32.xlu0 %v70, 64
    %v80 = vpop.permute.xlu0 %79
    %vm81 = vcmask 261120
    %v84 = vsel %vm81, %v58, %v72
    %v87 = vsel %vm81, %v59, %v74
    %vm88 = vcmask 523264
    %v90 = vsel %vm88, %v84, %v78
    %v92 = vsel %vm88, %v87, %v80
    %v93 = vld [vmem:[%s2] sm:$0xf]
    %v94 = vld [vmem:[%s2 + $0x4] sm:$0xf]
    %v95 = vld [vmem:[%s2 + $0x8] sm:$0xf]
    %v96 = vld [vmem:[%s2 + $0xc] sm:$0xf]
    %v97 = vld [vmem:[%s2 + $0x10] sm:$0xf]
    %v98 = vld [vmem:[%s2 + $0x14] sm:$0xf]
    %v99 = vld [vmem:[%s2 + $0x18] sm:$0xf]
    %v100 = vld [vmem:[%s2 + $0x1c] sm:$0xf]
    %v101 = vld [vmem:[%s2 + $0x20] sm:$0xf]
    %v102 = vld [vmem:[%s2 + $0x24] sm:$0xf]
    %v103 = vld [vmem:[%s2 + $0x28] sm:$0xf]
    %v104 = vld [vmem:[%s2 + $0x2c] sm:$0xf]
    %v105 = vld [vmem:[%s3] sm:$0x1]
    %v107 = vperm.slane %v105, 0
    %v121 = vunpack.c.l.b16 %v93
    %v122 = vunpack.c.l.b16 %v94
    %v123 = vunpack.c.l.b16 %v95
    %v124 = vunpack.c.l.b16 %v96
    %v125 = vunpack.c.l.b16 %v97
    %v126 = vunpack.c.l.b16 %v98
    %v127 = vunpack.c.l.b16 %v99
    %v128 = vunpack.c.l.b16 %v100
    %v129 = vunpack.c.l.b16 %v101
    %v130 = vunpack.c.l.b16 %v102
    %v131 = vunpack.c.l.b16 %v103
    %v132 = vunpack.c.l.b16 %v104
    %v133 = vpack.c.b16 %v122, %v121
    %v134 = vpack.c.b16 %v124, %v123
    %v135 = vpack.c.b16 %v126, %v125
    %v136 = vpack.c.b16 %v128, %v127
    %v137 = vpack.c.b16 %v130, %v129
    %v138 = vpack.c.b16 %v132, %v131
    %vm145 = vcmask 785408
    %v146 = vsel %vm145, %v90, 0
    %v148 = vsel %vm145, %v92, 0
    %150 = vmatpush.bf16.msra.mxu0 0
    %151 = vmatpush.bf16.msra.mxu0 0
    %152 = vmatpush.bf16.msra.mxu0 %v138
    %153 = vmatpush.bf16.msra.mxu0 %v137
    %154 = vmatpush.bf16.msra.mxu0 %v136
    %155 = vmatpush.bf16.msra.mxu0 %v135
    %156 = vmatpush.bf16.msra.mxu0 %v134
    %157 = vmatpush.bf16.msra.mxu0 %v133
    %158 = vmatmul.bf16.gmra.mxu0 %v146
    %v159 = vpop.f32.mrf.mxu0
    %v160 = vadd.f32 %v107, %v159
    %v161 = vpop.f32.mrf.mxu0
    %v162 = vadd.f32 %v107, %v161
    %163 = vmatmul.bf16.gmra.mxu0 %v148
    %v164 = vpop.f32.mrf.mxu0
    %v165 = vadd.f32 %v107, %v164
    %v166 = vpop.f32.mrf.mxu0
    %v167 = vadd.f32 %v107, %v166
    %168 = vdwg.mxu0
    %v169 = vld [vmem:[%s1] sm:$0xff]
    %v170 = vld [vmem:[%s1 + $0x8] sm:$0xff]
    %v171 = vld [vmem:[%s1 + $0x10] sm:$0xff]
    %v172 = vld [vmem:[%s1 + $0x18] sm:$0xff]
    %174 = vset.pattern.permute.xlu0 0
    %175 = vperm.xlu0 %174, %v169
    %v176 = vpop.permute.xlu0 %175
    %179 = vset.pattern.permute.xlu0 0
    %180 = vperm.xlu0 %179, %v170
    %v181 = vpop.permute.xlu0 %180
    %184 = vset.pattern.permute.xlu0 0
    %185 = vperm.xlu0 %184, %v171
    %v186 = vpop.permute.xlu0 %185
    %189 = vset.pattern.permute.xlu0 0
    %190 = vperm.xlu0 %189, %v172
    %v191 = vpop.permute.xlu0 %190
    %v193 = vadd.f32 %v160, %v176
    %v194 = vadd.f32 %v162, %v181
    %v195 = vadd.f32 %v165, %v186
    %v196 = vadd.f32 %v167, %v191
    %v197 = vmax.f32 %v193, 0.0
    %v198 = vmax.f32 %v194, 0.0
    %v199 = vmax.f32 %v195, 0.0
    %v200 = vmax.f32 %v196, 0.0
    %v201 = vmax.f32 %v197, %v198
    %v202 = vrot.slane %v201, 4
    %v203 = vmax.f32 %v201, %v202
    %v204 = vrot.slane %v203, 2
    %v205 = vmax.f32 %v203, %v204
    %v206 = vrot.slane %v205, 1
    %v207 = vmax.f32 %v205, %v206
    %v208 = vmax.f32 %v199, %v200
    %v209 = vrot.slane %v208, 4
    %v210 = vmax.f32 %v208, %v209
    %v211 = vrot.slane %v210, 2
    %v212 = vmax.f32 %v210, %v211
    %v213 = vrot.slane %v212, 1
    %v214 = vmax.f32 %v212, %v213
    %v215 = vtanh.pop %v207
    %v216 = vtanh.pop %v214
    %v217 = vld [vmem:[%s4] sm:$0xff]
    %v218 = vld [vmem:[%s4 + $0x8] sm:$0xff]
    %v219 = vld [vmem:[%s4 + $0x10] sm:$0xff]
    %v220 = vld [vmem:[%s4 + $0x18] sm:$0xff]
    %v221 = vld [vmem:[%s4 + $0x20] sm:$0xff]
    %v222 = vld [vmem:[%s4 + $0x28] sm:$0xff]
    %v223 = vld [vmem:[%s4 + $0x30] sm:$0xff]
    %v224 = vld [vmem:[%s4 + $0x38] sm:$0xff]
    %v225 = vld [vmem:[%s4 + $0x40] sm:$0xff]
    %v226 = vld [vmem:[%s4 + $0x48] sm:$0xff]
    %v227 = vld [vmem:[%s4 + $0x50] sm:$0xff]
    %v228 = vld [vmem:[%s4 + $0x58] sm:$0xff]
    %v229 = vld [vmem:[%s4 + $0x60] sm:$0xff]
    %v230 = vld [vmem:[%s4 + $0x68] sm:$0xff]
    %v231 = vld [vmem:[%s4 + $0x70] sm:$0xff]
    %v232 = vld [vmem:[%s4 + $0x78] sm:$0xff]
    %233 = vset.pattern.permute.xlu0 1
    %234 = vperm.xlu0 %233, %v169
    %v235 = vpop.permute.xlu0 %234
    %237 = vset.pattern.permute.xlu0 1
    %238 = vperm.xlu0 %237, %v170
    %v239 = vpop.permute.xlu0 %238
    %241 = vset.pattern.permute.xlu0 1
    %242 = vperm.xlu0 %241, %v171
    %v243 = vpop.permute.xlu0 %242
    %245 = vset.pattern.permute.xlu0 1
    %246 = vperm.xlu0 %245, %v172
    %v247 = vpop.permute.xlu0 %246
    %v249 = vadd.f32 %v160, %v235
    %v250 = vadd.f32 %v162, %v239
    %v251 = vadd.f32 %v165, %v243
    %v252 = vadd.f32 %v167, %v247
    %v253 = vmax.f32 %v249, 0.0
    %v254 = vmax.f32 %v250, 0.0
    %v255 = vmax.f32 %v251, 0.0
    %v256 = vmax.f32 %v252, 0.0
    %v257 = vmax.f32 %v253, %v254
    %v258 = vrot.slane %v257, 4
    %v259 = vmax.f32 %v257, %v258
    %v260 = vrot.slane %v259, 2
    %v261 = vmax.f32 %v259, %v260
    %v262 = vrot.slane %v261, 1
    %v263 = vmax.f32 %v261, %v262
    %v264 = vmax.f32 %v255, %v256
    %v265 = vrot.slane %v264, 4
    %v266 = vmax.f32 %v264, %v265
    %v267 = vrot.slane %v266, 2
    %v268 = vmax.f32 %v266, %v267
    %v269 = vrot.slane %v268, 1
    %v270 = vmax.f32 %v268, %v269
    %v271 = vtanh.pop %v263
    %v272 = vtanh.pop %v270
    %v273 = vld [vmem:[%s4 + $0x80] sm:$0xff]
    %v274 = vld [vmem:[%s4 + $0x88] sm:$0xff]
    %v275 = vld [vmem:[%s4 + $0x90] sm:$0xff]
    %v276 = vld [vmem:[%s4 + $0x98] sm:$0xff]
    %v277 = vld [vmem:[%s4 + $0xa0] sm:$0xff]
    %v278 = vld [vmem:[%s4 + $0xa8] sm:$0xff]
    %v279 = vld [vmem:[%s4 + $0xb0] sm:$0xff]
    %v280 = vld [vmem:[%s4 + $0xb8] sm:$0xff]
    %v281 = vld [vmem:[%s4 + $0xc0] sm:$0xff]
    %v282 = vld [vmem:[%s4 + $0xc8] sm:$0xff]
    %v283 = vld [vmem:[%s4 + $0xd0] sm:$0xff]
    %v284 = vld [vmem:[%s4 + $0xd8] sm:$0xff]
    %v285 = vld [vmem:[%s4 + $0xe0] sm:$0xff]
    %v286 = vld [vmem:[%s4 + $0xe8] sm:$0xff]
    %v287 = vld [vmem:[%s4 + $0xf0] sm:$0xff]
    %v288 = vld [vmem:[%s4 + $0xf8] sm:$0xff]
    %vm291 = vcmask 1041409
    %v292 = vsel %vm291, %v272, %v271
    %294 = vmatpush.msra.mxu0 %v288
    %295 = vmatpush.msra.mxu0 %v287
    %296 = vmatpush.msra.mxu0 %v286
    %297 = vmatpush.msra.mxu0 %v285
    %298 = vmatpush.msra.mxu0 %v284
    %299 = vmatpush.msra.mxu0 %v283
    %300 = vmatpush.msra.mxu0 %v282
    %301 = vmatpush.msra.mxu0 %v281
    %302 = vmatpush.msra.mxu0 %v280
    %303 = vmatpush.msra.mxu0 %v279
    %304 = vmatpush.msra.mxu0 %v278
    %305 = vmatpush.msra.mxu0 %v277
    %306 = vmatpush.msra.mxu0 %v276
    %307 = vmatpush.msra.mxu0 %v275
    %308 = vmatpush.msra.mxu0 %v274
    %309 = vmatpush.msra.mxu0 %v273
    %310 = vmatmul.f32.gmra.mxu0 %v292
    %v311 = vpop.f32.mrf.mxu0
    %v312 = vadd.f32 0.0, %v311
    %313 = vdwg.mxu0
    %v316 = vsel %vm291, %v216, %v215
    %318 = vmatpush.msra.mxu0 %v232
    %319 = vmatpush.msra.mxu0 %v231
    %320 = vmatpush.msra.mxu0 %v230
    %321 = vmatpush.msra.mxu0 %v229
    %322 = vmatpush.msra.mxu0 %v228
    %323 = vmatpush.msra.mxu0 %v227
    %324 = vmatpush.msra.mxu0 %v226
    %325 = vmatpush.msra.mxu0 %v225
    %326 = vmatpush.msra.mxu0 %v224
    %327 = vmatpush.msra.mxu0 %v223
    %328 = vmatpush.msra.mxu0 %v222
    %329 = vmatpush.msra.mxu0 %v221
    %330 = vmatpush.msra.mxu0 %v220
    %331 = vmatpush.msra.mxu0 %v219
    %332 = vmatpush.msra.mxu0 %v218
    %333 = vmatpush.msra.mxu0 %v217
    %334 = vmatmul.f32.gmra.mxu0 %v316
    %v335 = vpop.f32.mrf.mxu0
    %v336 = vadd.f32 %v312, %v335
    %337 = vdwg.mxu0
    %338 = vset.pattern.permute.xlu0 2
    %339 = vperm.xlu0 %338, %v169
    %v340 = vpop.permute.xlu0 %339
    %342 = vset.pattern.permute.xlu0 2
    %343 = vperm.xlu0 %342, %v170
    %v344 = vpop.permute.xlu0 %343
    %346 = vset.pattern.permute.xlu0 2
    %347 = vperm.xlu0 %346, %v171
    %v348 = vpop.permute.xlu0 %347
    %350 = vset.pattern.permute.xlu0 2
    %351 = vperm.xlu0 %350, %v172
    %v352 = vpop.permute.xlu0 %351
    %v354 = vadd.f32 %v160, %v340
    %v355 = vadd.f32 %v162, %v344
    %v356 = vadd.f32 %v165, %v348
    %v357 = vadd.f32 %v167, %v352
    %v358 = vmax.f32 %v354, 0.0
    %v359 = vmax.f32 %v355, 0.0
    %v360 = vmax.f32 %v356, 0.0
    %v361 = vmax.f32 %v357, 0.0
    %v362 = vmax.f32 %v358, %v359
    %v363 = vrot.slane %v362, 4
    %v364 = vmax.f32 %v362, %v363
    %v365 = vrot.slane %v364, 2
    %v366 = vmax.f32 %v364, %v365
    %v367 = vrot.slane %v366, 1
    %v368 = vmax.f32 %v366, %v367
    %v369 = vmax.f32 %v360, %v361
    %v370 = vrot.slane %v369, 4
    %v371 = vmax.f32 %v369, %v370
    %v372 = vrot.slane %v371, 2
    %v373 = vmax.f32 %v371, %v372
    %v374 = vrot.slane %v373, 1
    %v375 = vmax.f32 %v373, %v374
    %v376 = vtanh.pop %v368
    %v377 = vtanh.pop %v375
    %v378 = vld [vmem:[%s4 + $0x100] sm:$0xff]
    %v379 = vld [vmem:[%s4 + $0x108] sm:$0xff]
    %v380 = vld [vmem:[%s4 + $0x110] sm:$0xff]
    %v381 = vld [vmem:[%s4 + $0x118] sm:$0xff]
    %v382 = vld [vmem:[%s4 + $0x120] sm:$0xff]
    %v383 = vld [vmem:[%s4 + $0x128] sm:$0xff]
    %v384 = vld [vmem:[%s4 + $0x130] sm:$0xff]
    %v385 = vld [vmem:[%s4 + $0x138] sm:$0xff]
    %v386 = vld [vmem:[%s4 + $0x140] sm:$0xff]
    %v387 = vld [vmem:[%s4 + $0x148] sm:$0xff]
    %v388 = vld [vmem:[%s4 + $0x150] sm:$0xff]
    %v389 = vld [vmem:[%s4 + $0x158] sm:$0xff]
    %v390 = vld [vmem:[%s4 + $0x160] sm:$0xff]
    %v391 = vld [vmem:[%s4 + $0x168] sm:$0xff]
    %v392 = vld [vmem:[%s4 + $0x170] sm:$0xff]
    %v393 = vld [vmem:[%s4 + $0x178] sm:$0xff]
    %v396 = vsel %vm291, %v377, %v376
    %398 = vmatpush.msra.mxu0 %v393
    %399 = vmatpush.msra.mxu0 %v392
    %400 = vmatpush.msra.mxu0 %v391
    %401 = vmatpush.msra.mxu0 %v390
    %402 = vmatpush.msra.mxu0 %v389
    %403 = vmatpush.msra.mxu0 %v388
    %404 = vmatpush.msra.mxu0 %v387
    %405 = vmatpush.msra.mxu0 %v386
    %406 = vmatpush.msra.mxu0 %v385
    %407 = vmatpush.msra.mxu0 %v384
    %408 = vmatpush.msra.mxu0 %v383
    %409 = vmatpush.msra.mxu0 %v382
    %410 = vmatpush.msra.mxu0 %v381
    %411 = vmatpush.msra.mxu0 %v380
    %412 = vmatpush.msra.mxu0 %v379
    %413 = vmatpush.msra.mxu0 %v378
    %414 = vmatmul.f32.gmra.mxu0 %v396
    %v415 = vpop.f32.mrf.mxu0
    %v416 = vadd.f32 0.0, %v415
    %417 = vdwg.mxu0
    %v418 = vadd.f32 %v336, %v416
    %v419 = vld [vmem:[%s5] sm:$0x1]
    %v421 = vperm.slane %v419, 0
    %v423 = vadd.f32 %v418, %v421
    %424 = vst [vmem:[#allocation2] sm:$0x3] %v423
    // Predicated region
    $region26: #{pcnn_logits.1} parent=1 // pred_check
      _
    $region27: #{pcnn_logits.1} parent=1 // pred_check_branch
      %426 = sbr.rel (0) target = $region29
    $region28: #{pcnn_logits.1} parent=1 // pred_region
      %428 = vsyncadd [#allocation3], 0
      %s430 = sshll.u32 [#allocation2], 4
      %s431 = int_to_ptr.vmem [resolvable:$true] %s430
      %s432 = sshll.u32 %s6, 4
      %s433 = int_to_ptr.hbm [resolvable:$true] %s432
      %435 = dma.vmem_to_hbm [thread:$0]  %s431, 32, %s433, [#allocation3]
    $region29: #{pcnn_logits.1} parent=1 // pred_fallthru
      _
    // Predicated region
    $region30: #{pcnn_logits.1} parent=1 // pred_check
      _
    $region31: #{pcnn_logits.1} parent=1 // pred_check_branch
      %437 = sbr.rel (0) target = $region33
    $region32: #{pcnn_logits.1} parent=1 // pred_region
      %439 = dma.done [#allocation3], 32
    $region33: #{pcnn_logits.1} parent=1 // pred_fallthru
      _
    %440 = vsyncpa [#allocation3], 1

</llo_original>
